<compile_context>
chip_gen: v7x
topology: tpu7x:2x2x1
jax: 0.10.0
libtpu: 0.0.40
codegen_flags: <defaults>
</compile_context>

<pallas_src>
import jax
import jax.numpy as jnp
from jax.experimental import pallas as pl
from jax.experimental.pallas import tpu as pltpu

MAX_LENGTH = 512   # tokenizer(..., truncation=True, max_length=512, padding='max_length')
PAD_ID = 0         # T5 pad token id
EOS_ID = 1         # T5 eos token id (placed at position length-1)


def _tokenize_pack_kernel(raw_ids_ref, len_ref, out_ids_ref, out_mask_ref):
    """Build padded input_ids and attention_mask for one batch tile.

    raw_ids_ref : (TB, L) int   -- raw word-piece ids (garbage past length)
    len_ref     : (TB, 1) int32 -- raw sequence lengths (clamped in-kernel)
    out_ids_ref : (TB, L) int32 -- padded ids, EOS at len-1, PAD after
    out_mask_ref: (TB, L) int8  -- 1 for real tokens (incl. EOS), 0 for pad
    """
    TB, L = out_ids_ref.shape
    pos = jax.lax.broadcasted_iota(jnp.int32, (TB, L), 1)          # position index
    # truncation=True, max_length=L ; an empty input still gets an EOS token.
    # NOTE: forcing EOS at clamp(length,1,L)-1 overwrites the last real token
    # on truncated sequences — deliberate semantic choice (guaranteed EOS),
    # not exact HF-tokenizer parity.
    lengths = jnp.clip(len_ref[...].astype(jnp.int32), 1, L)       # (TB, 1)
    valid = pos < lengths                                          # (TB, L) bool
    is_eos = pos == (lengths - 1)                                  # last real slot

    ids = raw_ids_ref[...].astype(jnp.int32)
    ids = jnp.where(is_eos, jnp.int32(EOS_ID), ids)
    ids = jnp.where(valid, ids, jnp.int32(PAD_ID))

    out_ids_ref[...] = ids
    out_mask_ref[...] = valid.astype(out_mask_ref.dtype)


def _round_up(x, m):
    return ((x + m - 1) // m) * m


def _batch_tile_cap():
    """Per-TPU-generation cap on the batch tile (rows)."""
    try:
        kind = jax.devices()[0].device_kind.lower()
    except Exception:
        kind = ""
    if "v7" in kind:
        return 2048   # ~19 MiB double-buffered -> inside v7x 32 MiB scoped VMEM
    if "v6" in kind:
        return 1024   # ~9.5 MiB double-buffered on v6e
    return 512        # v5e (16 MiB scoped default) and unknown chips: stay safe


def _pick_batch_tile(B, cap):
    """Batch tile that keeps the grid at >= ~4 steps once B is non-trivial."""
    if B <= 64:
        return B                        # tiny batch: single full-extent block
    # Aim for >= 4 pipeline steps; keep the tile a multiple of 32 rows so the
    # int8 mask tile (32,128) and int16 input packing (16,128) stay aligned.
    tb = _round_up(pl.cdiv(B, 4), 32)
    return min(tb, cap)


def extract_features_labels(raw_ids, lengths, max_length=MAX_LENGTH,
                            mask_dtype=jnp.int8):
    """JAX wrapper mirroring Extract_feautres_labels.forward.

    raw_ids : (B, raw_len >= max_length) integer synthetic token ids (any int
              dtype — int16 recommended, T5 vocab 32128 fits)
    lengths : (B,) int number of real tokens (incl. EOS) per sentence
    returns : (ids int32, masks int8), each (B, max_length)
    """
    B, raw_len = raw_ids.shape
    assert raw_len >= max_length, (
        f"raw_ids must provide at least max_length={max_length} columns, got {raw_len}")
    assert max_length % 128 == 0, "max_length must be lane-aligned (multiple of 128)"

    # (B,) -> (B,1) int32: negligible traffic, broadcasts for free in-kernel.
    lengths = lengths.astype(jnp.int32).reshape(B, 1)

    cap = _batch_tile_cap()
    TB = _pick_batch_tile(B, cap)
    grid = (pl.cdiv(B, TB),)

    in_itemsize = jnp.dtype(raw_ids.dtype).itemsize
    mask_itemsize = jnp.dtype(mask_dtype).itemsize

    # Explicit scoped-VMEM budget: double-buffered resident blocks + headroom.
    tile_bytes = TB * max_length * (in_itemsize + 4 + mask_itemsize) + TB * 4
    vmem_limit = int(max(2 * tile_bytes + (2 << 20), 16 << 20))

    # Bandwidth-only op: tell the XLA scheduler so it can overlap neighbours.
    bytes_accessed = int(B * max_length * (in_itemsize + 4 + mask_itemsize) + B * 4)

    ids, masks = pl.pallas_call(
        _tokenize_pack_kernel,
        out_shape=(
            jax.ShapeDtypeStruct((B, max_length), jnp.int32),
            jax.ShapeDtypeStruct((B, max_length), mask_dtype),
        ),
        grid=grid,
        in_specs=[
            # Truncation for free: only lane-block 0 (first max_length tokens)
            # of the raw id array is ever DMA'd in.
            pl.BlockSpec((TB, max_length), lambda i: (i, 0)),
            pl.BlockSpec((TB, 1), lambda i: (i, 0)),
        ],
        out_specs=[
            pl.BlockSpec((TB, max_length), lambda i: (i, 0)),
            pl.BlockSpec((TB, max_length), lambda i: (i, 0)),
        ],
        compiler_params=pltpu.CompilerParams(
            dimension_semantics=("parallel",),
            vmem_limit_bytes=vmem_limit),
        cost_estimate=pl.CostEstimate(
            flops=0, transcendentals=0, bytes_accessed=bytes_accessed),
    )(raw_ids, lengths)
    return ids, masks


def _reference(raw_ids, lengths, max_length=MAX_LENGTH):
    """Pure-JAX reference of the same semantics."""
    B = raw_ids.shape[0]
    lengths = jnp.clip(lengths.astype(jnp.int32), 1, max_length).reshape(B, 1)
    raw = raw_ids[:, :max_length].astype(jnp.int32)
    pos = jnp.arange(max_length, dtype=jnp.int32)[None, :]
    valid = pos < lengths
    ids = jnp.where(pos == lengths - 1, EOS_ID, raw)
    ids = jnp.where(valid, ids, PAD_ID)
    return ids, valid.astype(jnp.int8)


if __name__ == "__main__":
    # TODO(synk): real T5Tokenizer string->id mapping (SentencePiece) has no
    # Pallas equivalent; sentences are represented by synthetic token streams.
    key = jax.random.PRNGKey(0)

    batch = 4
    raw_len = 640  # > MAX_LENGTH so truncation is exercised via the BlockSpec
    # synthetic word-piece ids in [2, 32100): 0/1 reserved for pad/eos.
    # int16 input halves the HBM read traffic (T5 vocab 32128 fits in int16).
    raw_ids = jax.random.randint(
        key, (batch, raw_len), 2, 32100, dtype=jnp.int32).astype(jnp.int16)
    # variable sentence lengths: empty, short, medium, one that hits truncation
    lengths = jnp.array([0, 23, 130, 600], dtype=jnp.int32)

    ids, masks = extract_features_labels(raw_ids, lengths)
    ids, masks = jax.block_until_ready((ids, masks))

    ref_ids, ref_masks = _reference(raw_ids, lengths)
    assert ids.shape == (batch, MAX_LENGTH) and masks.shape == (batch, MAX_LENGTH)
    assert ids.dtype == jnp.int32 and masks.dtype == jnp.int8
    assert bool(jnp.all(ids == ref_ids))
    assert bool(jnp.all(masks == ref_masks))

    print("KERNEL_OK")
</pallas_src>

<mosaic_0001>
module attributes {stable_mosaic.version = 11 : i64} {
  func.func @_tokenize_pack_kernel(%arg0: i32, %arg1: memref<4x512xi16, #tpu.memory_space<vmem>>, %arg2: memref<4x1xi32, #tpu.memory_space<vmem>>, %arg3: memref<4x512xi32, #tpu.memory_space<vmem>>, %arg4: memref<4x512xi8, #tpu.memory_space<vmem>>) attributes {dimension_semantics = [#tpu.dimension_semantics<parallel>], iteration_bounds = array<i64: 1>, scalar_prefetch = 0 : i64, scratch_operands = 0 : i64, tpu.core_type = #tpu.core_type<tc>, window_params = [{transform_indices = @transform_0, window_bounds = array<i64: 4, 512>}, {transform_indices = @transform_1, window_bounds = array<i64: 4, 1>}, {transform_indices = @transform_2, window_bounds = array<i64: 4, 512>}, {transform_indices = @transform_3, window_bounds = array<i64: 4, 512>}]} {
    %0 = tpu.iota {dimensions = array<i32: 1>} : vector<4x512xi32>
    %c0 = arith.constant 0 : index
    %c0_0 = arith.constant 0 : index
    %1 = vector.load %arg2[%c0, %c0_0] : memref<4x1xi32, #tpu.memory_space<vmem>>, vector<4x1xi32>
    %c1_i32 = arith.constant 1 : i32
    %c512_i32 = arith.constant 512 : i32
    %2 = vector.broadcast %c1_i32 : i32 to vector<4x1xi32>
    %3 = arith.maxsi %2, %1 : vector<4x1xi32>
    %4 = vector.broadcast %c512_i32 : i32 to vector<4x1xi32>
    %5 = arith.minsi %4, %3 : vector<4x1xi32>
    %6 = vector.broadcast %5 : vector<4x1xi32> to vector<4x512xi32>
    %7 = arith.cmpi slt, %0, %6 : vector<4x512xi32>
    %c1_i32_1 = arith.constant 1 : i32
    %8 = vector.broadcast %c1_i32_1 : i32 to vector<4x1xi32>
    %9 = arith.subi %5, %8 : vector<4x1xi32>
    %10 = vector.broadcast %9 : vector<4x1xi32> to vector<4x512xi32>
    %11 = arith.cmpi eq, %0, %10 : vector<4x512xi32>
    %c0_2 = arith.constant 0 : index
    %c0_3 = arith.constant 0 : index
    %12 = vector.load %arg1[%c0_2, %c0_3] : memref<4x512xi16, #tpu.memory_space<vmem>>, vector<4x512xi16>
    %13 = arith.extsi %12 : vector<4x512xi16> to vector<4x512xi32>
    %c1_i32_4 = arith.constant 1 : i32
    %14 = vector.broadcast %c1_i32_4 : i32 to vector<4x512xi32>
    %15 = arith.select %11, %14, %13 : vector<4x512xi1>, vector<4x512xi32>
    %c0_i32 = arith.constant 0 : i32
    %16 = vector.broadcast %c0_i32 : i32 to vector<4x512xi32>
    %17 = arith.select %7, %15, %16 : vector<4x512xi1>, vector<4x512xi32>
    %c0_5 = arith.constant 0 : index
    %c0_6 = arith.constant 0 : index
    %18 = vector.load %arg3[%c0_5, %c0_6] : memref<4x512xi32, #tpu.memory_space<vmem>>, vector<4x512xi32>
    tpu.vector_store %arg3[%c0_5, %c0_6], %17 {strides = array<i32>} : memref<4x512xi32, #tpu.memory_space<vmem>>, vector<4x512xi32>,
    %19 = arith.extui %7 : vector<4x512xi1> to vector<4x512xi8>
    %c0_7 = arith.constant 0 : index
    %c0_8 = arith.constant 0 : index
    %20 = vector.load %arg4[%c0_7, %c0_8] : memref<4x512xi8, #tpu.memory_space<vmem>>, vector<4x512xi8>
    tpu.vector_store %arg4[%c0_7, %c0_8], %19 {strides = array<i32>} : memref<4x512xi8, #tpu.memory_space<vmem>>, vector<4x512xi8>,
    return
  }
  func.func @transform_0(%arg0: i32) -> (i32, i32) {
    %c0_i32 = arith.constant 0 : i32
    %c0_i32_0 = arith.constant 0 : i32
    return %arg0, %c0_i32 : i32, i32
  }
  func.func @transform_1(%arg0: i32) -> (i32, i32) {
    %c0_i32 = arith.constant 0 : i32
    %c0_i32_0 = arith.constant 0 : i32
    return %arg0, %c0_i32 : i32, i32
  }
  func.func @transform_2(%arg0: i32) -> (i32, i32) {
    %c0_i32 = arith.constant 0 : i32
    %c0_i32_0 = arith.constant 0 : i32
    return %arg0, %c0_i32 : i32, i32
  }
  func.func @transform_3(%arg0: i32) -> (i32, i32) {
    %c0_i32 = arith.constant 0 : i32
    %c0_i32_0 = arith.constant 0 : i32
    return %arg0, %c0_i32 : i32, i32
  }
}

</mosaic_0001>

<llo_original>
// kernel: tpu_custom_call.1
$region0: #{tpu_custom_call.1}
  #allocation0 [shape = 'u32[]', space=smem, size = 0x4, offset = 0x4, fixed_abs, tag = 'smem constant byte address 0x4 - core index']
  #allocation1 [shape = 'u32[144,128]{1,0:T(1,128)}', space=vmem, size = 0x12000, scoped, tag = 'internal scratch']
  %s0 = inlined_call_operand.hbm [shape: s16[4,640], index: 0, kind: input, shape index: {}]
  %s1 = inlined_call_operand.vmem [shape: s32[4,1], index: 1, kind: input, shape index: {}]
  %s2 = inlined_call_operand.hbm [shape: s32[4,512], index: 2, kind: output, shape index: {0}]
  %s3 = inlined_call_operand.hbm [shape: s8[4,512], index: 3, kind: output, shape index: {1}]
  %4 = xla_tuple %s2, %s3
  %s5 = sld [smem:[#allocation0]]
  $region30: #{tpu_custom_call.1} parent=0
    _
  %s7 = ssub.s32 1, %s5
  %s8 = scalar_select 0, %s7, %s5
  $region1: #{tpu_custom_call.1} parent=0
    #allocation2 [shape = 'u8[4096]{0}', space=vmem, size = 0x1000, scoped, tag = 'input window, operand 0, single buffered']
    #allocation3 [shape = 's32[1]{0}', space=sflag, size = 0x4, scoped, tag = 'scoped memory for tpu_custom_call.1']
    #allocation4 [shape = 's32[1]{0}', space=sflag, size = 0x4, scoped, tag = 'scoped memory for tpu_custom_call.1']
    #allocation5 [shape = 'u8[8192]{0}', space=vmem, size = 0x2000, scoped, tag = 'output window, operand 0, single buffered']
    #allocation6 [shape = 'u8[2048]{0}', space=vmem, size = 0x800, scoped, tag = 'output window, operand 1, single buffered']
    #allocation7 [shape = 's32[1]{0}', space=sflag, size = 0x4, scoped, tag = 'scoped memory for tpu_custom_call.1']
    %9 = vsyncpa [#allocation3], 0
    %10 = vsyncpa [#allocation4], 0
    %11 = vsyncpa [#allocation7], 0
    // Predicated region
    $region2: #{tpu_custom_call.1} parent=1 // pred_check
      _
    $region3: #{tpu_custom_call.1} parent=1 // pred_check_branch
      %13 = sbr.rel (0) target = $region5
    $region4: #{tpu_custom_call.1} parent=1 // pred_region
      %s15 = ssub.s32 128, 128
      %16 = vsyncadd [#allocation3], %s15
      %s18 = sshll.u32 [#allocation2], 4
      %s19 = int_to_ptr.vmem [resolvable:$true] %s18
      %21 = dma.hbm_to_vmem [thread:$0]  %s0, 128, %s19, [#allocation3]
    $region5: #{tpu_custom_call.1} parent=1 // pred_fallthru
      _
    // Predicated region
    $region6: #{tpu_custom_call.1} parent=1 // pred_check
      _
    $region7: #{tpu_custom_call.1} parent=1 // pred_check_branch
      %23 = sbr.rel (0) target = $region9
    $region8: #{tpu_custom_call.1} parent=1 // pred_region
      _
    $region9: #{tpu_custom_call.1} parent=1 // pred_fallthru
      _
    // Predicated region
    $region10: #{tpu_custom_call.1} parent=1 // pred_check
      _
    $region11: #{tpu_custom_call.1} parent=1 // pred_check_branch
      %25 = sbr.rel (0) target = $region13
    $region12: #{tpu_custom_call.1} parent=1 // pred_region
      %26 = dma.done [#allocation3], 128
    $region13: #{tpu_custom_call.1} parent=1 // pred_fallthru
      _
    %v29 = vlaneseq
    %v30 = vand.u32 %v29, 127
    %v31 = vadd.s32 %v30, 128
    %v32 = vadd.s32 %v30, 256
    %v33 = vadd.s32 %v30, 384
    %v34 = vld [vmem:[%s1] sm:$0xf]
    %vm35 = vcmp.gt.s32.totalorder %v34, 1
    %v36 = vsel %vm35, %v34, 1
    %vm37 = vcmp.lt.s32.totalorder %v36, 512
    %v38 = vsel %vm37, %v36, 512
    %39 = vset.pattern.permute.xlu0 0
    %40 = vperm.xlu0 %39, %v38
    %v41 = vpop.permute.xlu0 %40
    %vm42 = vcmp.lt.s32.totalorder %v30, %v41
    %vm43 = vcmp.lt.s32.totalorder %v31, %v41
    %vm44 = vcmp.lt.s32.totalorder %v32, %v41
    %vm45 = vcmp.lt.s32.totalorder %v33, %v41
    %v46 = vsub.s32 %v38, 1
    %47 = vset.pattern.permute.xlu0 0
    %48 = vperm.xlu0 %47, %v46
    %v49 = vpop.permute.xlu0 %48
    %vm50 = vcmp.eq.s32.totalorder %v30, %v49
    %vm51 = vcmp.eq.s32.totalorder %v31, %v49
    %vm52 = vcmp.eq.s32.totalorder %v32, %v49
    %vm53 = vcmp.eq.s32.totalorder %v33, %v49
    %v54 = vld [vmem:[#allocation2] sm:$0xff]
    %v55 = vunpack.c.l.b16 %v54
    %v56 = vunpack.c.h.b16 %v54
    %v57 = vcombine.high %v55, %v55
    %v58 = vcombine.high %v56, %v56
    %v59 = vsel %vm50, 1, %v55
    %v60 = vsel %vm51, 1, %v57
    %v61 = vsel %vm52, 1, %v56
    %v62 = vsel %vm53, 1, %v58
    %v63 = vsel %vm42, %v59, 0
    %v64 = vsel %vm43, %v60, 0
    %v65 = vsel %vm44, %v61, 0
    %v66 = vsel %vm45, %v62, 0
    %v67 = vcombine.low %v63, %v64
    %v68 = vcombine.low %v65, %v66
    %69 = vst [vmem:[#allocation5] sm:$0xff] %v67
    %70 = vst [vmem:[#allocation5 + $0x8] sm:$0xff] %v68
    %vm71 = vmpackc.low %vm42, %vm42
    %vm72 = vmpackc.even %vm71, %vm71
    %vm73 = vmpackc.low %vm43, %vm43
    %vm74 = vmpackc.even %vm73, %vm73
    %vm75 = vmpackc.low %vm44, %vm44
    %vm76 = vmpackc.even %vm75, %vm75
    %vm77 = vmpackc.low %vm45, %vm45
    %vm78 = vmpackc.even %vm77, %vm77
    %v79 = vsel %vm72, 16843009, 0
    %v80 = vsel %vm74, 16843009, 0
    %v81 = vsel %vm76, 16843009, 0
    %v82 = vsel %vm78, 16843009, 0
    %v83 = vcombine.low %v79, %v80
    %v84 = vcombine.low %v81, %v82
    %v86 = vunpack.c.l.s4 1966171168
    %v87 = vunpack.c.0.s8 %v86
    %v88 = vlaneseq
    %v89 = vshrl.u32 %v88, 7
    %v90 = vsub.s32 %v87, %v89
    %v91 = vrot.slane %v83, %v90
    %v93 = vunpack.c.l.s4 1966171168
    %v94 = vunpack.c.0.s8 %v93
    %v95 = vlaneseq
    %v96 = vshrl.u32 %v95, 7
    %v97 = vsub.s32 %v94, %v96
    %v98 = vrot.slane %v84, %v97
    %v99 = vcombine.low %v91, %v98
    %v101 = vunpack.c.l.s4 1966171168
    %v102 = vunpack.c.0.s8 %v101
    %v103 = vlaneseq
    %v104 = vshrl.u32 %v103, 7
    %v105 = vsub.s32 %v102, %v104
    %v106 = vrot.slane %v99, %v105
    %107 = vst [vmem:[#allocation6] sm:$0xf] %v106
    // Predicated region
    $region14: #{tpu_custom_call.1} parent=1 // pred_check
      _
    $region15: #{tpu_custom_call.1} parent=1 // pred_check_branch
      %109 = sbr.rel (0) target = $region17
    $region16: #{tpu_custom_call.1} parent=1 // pred_region
      %s111 = ssub.s32 256, 256
      %112 = vsyncadd [#allocation4], %s111
      %s114 = sshll.u32 [#allocation5], 4
      %s115 = int_to_ptr.vmem [resolvable:$true] %s114
      %117 = dma.vmem_to_hbm [thread:$0]  %s115, 256, %s2, [#allocation4]
    $region17: #{tpu_custom_call.1} parent=1 // pred_fallthru
      _
    // Predicated region
    $region18: #{tpu_custom_call.1} parent=1 // pred_check
      _
    $region19: #{tpu_custom_call.1} parent=1 // pred_check_branch
      %119 = sbr.rel (0) target = $region21
    $region20: #{tpu_custom_call.1} parent=1 // pred_region
      %s121 = ssub.s32 64, 64
      %122 = vsyncadd [#allocation7], %s121
      %s124 = sshll.u32 [#allocation6], 4
      %s125 = int_to_ptr.vmem [resolvable:$true] %s124
      %127 = dma.vmem_to_hbm [thread:$0]  %s125, 64, %s3, [#allocation7]
    $region21: #{tpu_custom_call.1} parent=1 // pred_fallthru
      _
    // Predicated region
    $region22: #{tpu_custom_call.1} parent=1 // pred_check
      _
    $region23: #{tpu_custom_call.1} parent=1 // pred_check_branch
      %129 = sbr.rel (0) target = $region25
    $region24: #{tpu_custom_call.1} parent=1 // pred_region
      %130 = dma.done [#allocation4], 256
    $region25: #{tpu_custom_call.1} parent=1 // pred_fallthru
      _
    // Predicated region
    $region26: #{tpu_custom_call.1} parent=1 // pred_check
      _
    $region27: #{tpu_custom_call.1} parent=1 // pred_check_branch
      %132 = sbr.rel (0) target = $region29
    $region28: #{tpu_custom_call.1} parent=1 // pred_region
      %133 = dma.done [#allocation7], 64
    $region29: #{tpu_custom_call.1} parent=1 // pred_fallthru
      _
    %134 = vsyncpa [#allocation3], 1
    %135 = vsyncpa [#allocation4], 1
    %136 = vsyncpa [#allocation7], 1

</llo_original>
